<compile_context>
chip_gen: v6e
topology: v6e:2x2x1
jax: 0.10.0
libtpu: 0.0.40
codegen_flags: <defaults>
</compile_context>

<pallas_src>
import functools

import jax
import jax.numpy as jnp
from jax import lax
from jax.experimental import pallas as pl
from jax.experimental.pallas import tpu as pltpu

LANE = 128
# 2048 rows * 128 lanes * 4 B = 1 MiB per f32 input block; 2 streams x 2
# pipeline buffers = 4 MiB, comfortably inside the scoped-VMEM budget on
# v5e (16 MiB default, raised below), v6e (32 MiB) and v7x (32/64 MiB).
MAX_BLOCK_ROWS = 2048


def _bbce_block_kernel(pred_ref, gt_ref, out_ref, *, block_rows, n_full_rows,
                       n_rem, needs_mask):
    """Per-block partial sums, sublane-reduced to shape (1, 3, 128).

    out row 0: sum(gt)
    out row 1: sum((1 - gt) * pred + softplus(-pred))
    out row 2: sum(gt * softplus(-pred))
    """
    # Cast to f32 inside the kernel (inputs stay narrow in HBM).
    pred = pred_ref[...].astype(jnp.float32)
    gt = gt_ref[...].astype(jnp.float32)

    # Numerically stable softplus(-pred) = log(1 + exp(-pred)).
    sp = jnp.maximum(-pred, 0.0) + jnp.log1p(jnp.exp(-jnp.abs(pred)))

    g = gt
    a = (1.0 - gt) * pred + sp
    b = gt * sp

    if needs_mask:
        # Static decision: only emitted when lane padding exists or the last
        # grid block runs past the end of the array.  Non-last blocks are
        # fully in-bounds, so the test is a no-op there (cheap VALU filler on
        # a mem-bound kernel).  Selection via where() also neutralizes any
        # NaN/Inf read from the out-of-bounds region of the last block.
        shape = (block_rows, LANE)
        row = (lax.broadcasted_iota(jnp.int32, shape, 0)
               + pl.program_id(0) * block_rows)
        lane = lax.broadcasted_iota(jnp.int32, shape, 1)
        valid = (row < n_full_rows) | ((row == n_full_rows) & (lane < n_rem))
        g = jnp.where(valid, g, 0.0)
        a = jnp.where(valid, a, 0.0)
        b = jnp.where(valid, b, 0.0)

    # Sublane-only reduction (cross-vreg VALU adds + one sublane reduce);
    # the final lane reduction over all blocks happens once in the wrapper.
    out_ref[0, 0:1, :] = jnp.sum(g, axis=0, keepdims=True)
    out_ref[0, 1:2, :] = jnp.sum(a, axis=0, keepdims=True)
    out_ref[0, 2:3, :] = jnp.sum(b, axis=0, keepdims=True)


def bbce_with_logit_loss(pred, gt):
    """Balanced BCEWithLogits loss. pred/gt: same shape (e.g. NCHW)."""
    assert pred.shape == gt.shape
    eps = 1e-10
    n = pred.size

    # Lane-dense view: flatten to (rows, 128).  Reshape of contiguous data is
    # free; a padded copy is only materialized when n % 128 != 0.
    rows = (n + LANE - 1) // LANE
    pad = rows * LANE - n
    pred_flat = pred.reshape(-1)
    gt_flat = gt.reshape(-1)
    if pad:
        pred_flat = jnp.pad(pred_flat, (0, pad))
        gt_flat = jnp.pad(gt_flat, (0, pad))
    pred2d = pred_flat.reshape(rows, LANE)
    gt2d = gt_flat.reshape(rows, LANE)

    # Large streaming blocks; ragged last block handled by the in-kernel mask.
    block_rows = rows if rows <= MAX_BLOCK_ROWS else MAX_BLOCK_ROWS
    grid = pl.cdiv(rows, block_rows)
    needs_mask = (pad != 0) or (rows % block_rows != 0)

    kernel = functools.partial(
        _bbce_block_kernel,
        block_rows=block_rows,
        n_full_rows=n // LANE,
        n_rem=n % LANE,
        needs_mask=needs_mask,
    )

    in_spec = pl.BlockSpec((block_rows, LANE), lambda i: (i, 0))
    partials = pl.pallas_call(
        kernel,
        out_shape=jax.ShapeDtypeStruct((grid, 3, LANE), jnp.float32),
        grid=(grid,),
        in_specs=[in_spec, in_spec],
        out_specs=pl.BlockSpec((1, 3, LANE), lambda i: (i, 0, 0)),
        compiler_params=pltpu.CompilerParams(
            dimension_semantics=("parallel",),   # per-block outputs -> no race
            vmem_limit_bytes=32 * 1024 * 1024,   # raise v5e's 16 MiB default
        ),
    )(pred2d, gt2d)

    # Scalar finalization (glue): collapse per-block lane partials.
    sums = jnp.sum(partials, axis=(0, 2))           # (3,)
    s_gt, s_a, s_b = sums[0], sums[1], sums[2]
    nf = jnp.float32(n)
    count_pos = s_gt + eps
    count_neg = nf - s_gt
    ratio = count_neg / count_pos
    w_neg = count_pos / (count_pos + count_neg)
    mean_bce = (s_a + (ratio - 1.0) * s_b) / nf
    return w_neg * mean_bce


def _reference(pred, gt):
    """Pure-JAX reference mirroring the PyTorch module."""
    eps = 1e-10
    pred = pred.astype(jnp.float32)
    gt = gt.astype(jnp.float32)
    count_pos = jnp.sum(gt) + eps
    count_neg = jnp.sum(1.0 - gt)
    ratio = count_neg / count_pos
    w_neg = count_pos / (count_pos + count_neg)
    sp = jnp.maximum(-pred, 0.0) + jnp.log1p(jnp.exp(-jnp.abs(pred)))
    per_elem = (1.0 - gt) * pred + (1.0 + (ratio - 1.0) * gt) * sp
    return w_neg * jnp.mean(per_elem)


if __name__ == "__main__":
    key = jax.random.PRNGKey(0)
    k1, k2 = jax.random.split(key)

    # NCHW-shaped example inputs, as a segmentation loss would see.
    pred = jax.random.normal(k1, (2, 4, 16, 16), dtype=jnp.float32)
    gt = jax.random.bernoulli(k2, p=0.3, shape=(2, 4, 16, 16)).astype(jnp.float32)
    loss = jax.block_until_ready(bbce_with_logit_loss(pred, gt))
    ref = jax.block_until_ready(_reference(pred, gt))
    assert jnp.allclose(loss, ref, rtol=1e-5, atol=1e-6), (loss, ref)

    # Ragged shape (n % 128 != 0) to exercise the in-kernel tail mask.
    k3, k4 = jax.random.split(k2)
    pred_r = jax.random.normal(k3, (2, 3, 7, 11), dtype=jnp.float32)
    gt_r = jax.random.bernoulli(k4, p=0.4, shape=(2, 3, 7, 11)).astype(jnp.float32)
    loss_r = jax.block_until_ready(bbce_with_logit_loss(pred_r, gt_r))
    ref_r = jax.block_until_ready(_reference(pred_r, gt_r))
    assert jnp.allclose(loss_r, ref_r, rtol=1e-5, atol=1e-6), (loss_r, ref_r)

    print("KERNEL_OK")
</pallas_src>

<mosaic_0001>
module attributes {stable_mosaic.version = 11 : i64} {
  func.func @_bbce_block_kernel(%arg0: i32, %arg1: memref<16x128xf32, #tpu.memory_space<vmem>>, %arg2: memref<16x128xf32, #tpu.memory_space<vmem>>, %arg3: memref<1x3x128xf32, #tpu.memory_space<vmem>>) attributes {dimension_semantics = [#tpu.dimension_semantics<parallel>], iteration_bounds = array<i64: 1>, scalar_prefetch = 0 : i64, scratch_operands = 0 : i64, tpu.core_type = #tpu.core_type<tc>, window_params = [{transform_indices = @transform_0, window_bounds = array<i64: 16, 128>}, {transform_indices = @transform_1, window_bounds = array<i64: 16, 128>}, {transform_indices = @transform_2, window_bounds = array<i64: 1, 3, 128>}]} {
    %c0 = arith.constant 0 : index
    %c0_0 = arith.constant 0 : index
    %0 = vector.load %arg1[%c0, %c0_0] : memref<16x128xf32, #tpu.memory_space<vmem>>, vector<16x128xf32>
    %c0_1 = arith.constant 0 : index
    %c0_2 = arith.constant 0 : index
    %1 = vector.load %arg2[%c0_1, %c0_2] : memref<16x128xf32, #tpu.memory_space<vmem>>, vector<16x128xf32>
    %cst = arith.constant 0.000000e+00 : f32
    %2 = vector.broadcast %cst : f32 to vector<16x128xf32>
    %3 = arith.subf %2, %0 : vector<16x128xf32>
    %cst_3 = arith.constant 0.000000e+00 : f32
    %4 = vector.broadcast %cst_3 : f32 to vector<16x128xf32>
    %5 = arith.maximumf %3, %4 : vector<16x128xf32>
    %6 = math.absf %0 : vector<16x128xf32>
    %cst_4 = arith.constant 0.000000e+00 : f32
    %7 = vector.broadcast %cst_4 : f32 to vector<16x128xf32>
    %8 = arith.subf %7, %6 : vector<16x128xf32>
    %9 = math.exp %8 : vector<16x128xf32>
    %10 = math.log1p %9 : vector<16x128xf32>
    %11 = arith.addf %5, %10 : vector<16x128xf32>
    %cst_5 = arith.constant 1.000000e+00 : f32
    %12 = vector.broadcast %cst_5 : f32 to vector<16x128xf32>
    %13 = arith.subf %12, %1 : vector<16x128xf32>
    %14 = arith.mulf %13, %0 : vector<16x128xf32>
    %15 = arith.addf %14, %11 : vector<16x128xf32>
    %16 = arith.mulf %1, %11 : vector<16x128xf32>
    %cst_6 = arith.constant dense<0.000000e+00> : vector<128xf32>
    %17 = vector.multi_reduction <add>, %1, %cst_6 [0] : vector<16x128xf32> to vector<128xf32>
    %18 = vector.shape_cast %17 : vector<128xf32> to vector<1x128xf32>
    %c0_7 = arith.constant 0 : index
    %c0_8 = arith.constant 0 : index
    %c0_9 = arith.constant 0 : index
    %19 = vector.load %arg3[%c0_7, %c0_8, %c0_9] : memref<1x3x128xf32, #tpu.memory_space<vmem>>, vector<1x1x128xf32>
    %20 = vector.shape_cast %19 : vector<1x1x128xf32> to vector<1x128xf32>
    %21 = vector.shape_cast %18 : vector<1x128xf32> to vector<1x1x128xf32>
    tpu.vector_store %arg3[%c0_7, %c0_8, %c0_9], %21 {strides = array<i32>} : memref<1x3x128xf32, #tpu.memory_space<vmem>>, vector<1x1x128xf32>,
    %cst_10 = arith.constant dense<0.000000e+00> : vector<128xf32>
    %22 = vector.multi_reduction <add>, %15, %cst_10 [0] : vector<16x128xf32> to vector<128xf32>
    %23 = vector.shape_cast %22 : vector<128xf32> to vector<1x128xf32>
    %c0_11 = arith.constant 0 : index
    %c1 = arith.constant 1 : index
    %c0_12 = arith.constant 0 : index
    %24 = vector.load %arg3[%c0_11, %c1, %c0_12] : memref<1x3x128xf32, #tpu.memory_space<vmem>>, vector<1x1x128xf32>
    %25 = vector.shape_cast %24 : vector<1x1x128xf32> to vector<1x128xf32>
    %26 = vector.shape_cast %23 : vector<1x128xf32> to vector<1x1x128xf32>
    tpu.vector_store %arg3[%c0_11, %c1, %c0_12], %26 {strides = array<i32>} : memref<1x3x128xf32, #tpu.memory_space<vmem>>, vector<1x1x128xf32>,
    %cst_13 = arith.constant dense<0.000000e+00> : vector<128xf32>
    %27 = vector.multi_reduction <add>, %16, %cst_13 [0] : vector<16x128xf32> to vector<128xf32>
    %28 = vector.shape_cast %27 : vector<128xf32> to vector<1x128xf32>
    %c0_14 = arith.constant 0 : index
    %c2 = arith.constant 2 : index
    %c0_15 = arith.constant 0 : index
    %29 = vector.load %arg3[%c0_14, %c2, %c0_15] : memref<1x3x128xf32, #tpu.memory_space<vmem>>, vector<1x1x128xf32>
    %30 = vector.shape_cast %29 : vector<1x1x128xf32> to vector<1x128xf32>
    %31 = vector.shape_cast %28 : vector<1x128xf32> to vector<1x1x128xf32>
    tpu.vector_store %arg3[%c0_14, %c2, %c0_15], %31 {strides = array<i32>} : memref<1x3x128xf32, #tpu.memory_space<vmem>>, vector<1x1x128xf32>,
    return
  }
  func.func @transform_0(%arg0: i32) -> (i32, i32) {
    %c0_i32 = arith.constant 0 : i32
    %c0_i32_0 = arith.constant 0 : i32
    return %arg0, %c0_i32 : i32, i32
  }
  func.func @transform_1(%arg0: i32) -> (i32, i32) {
    %c0_i32 = arith.constant 0 : i32
    %c0_i32_0 = arith.constant 0 : i32
    return %arg0, %c0_i32 : i32, i32
  }
  func.func @transform_2(%arg0: i32) -> (i32, i32, i32) {
    %c0_i32 = arith.constant 0 : i32
    %c0_i32_0 = arith.constant 0 : i32
    %c0_i32_1 = arith.constant 0 : i32
    return %arg0, %c0_i32, %c0_i32_0 : i32, i32, i32
  }
}

</mosaic_0001>

<llo_original>
// kernel: tpu_custom_call.1
$region0: #{tpu_custom_call.1}
  #allocation0 [shape = 'u32[]', space=smem, size = 0x4, offset = 0x4, fixed_abs, tag = 'smem constant byte address 0x4 - core index']
  #allocation1 [shape = 'u32[144,128]{1,0:T(1,128)}', space=vmem, size = 0x12000, scoped, tag = 'internal scratch']
  %s0 = inlined_call_operand.hbm [shape: f32[16,128], index: 0, kind: input, shape index: {}]
  %s1 = inlined_call_operand.hbm [shape: f32[16,128], index: 1, kind: input, shape index: {}]
  %s2 = inlined_call_operand.vmem [shape: f32[1,3,128], index: 2, kind: output, shape index: {}]
  %s3 = sld [smem:[#allocation0]]
  $region26: #{tpu_custom_call.1} parent=0
    _
  %s5 = ssub.s32 1, %s3
  %s6 = scalar_select 0, %s5, %s3
  $region1: #{tpu_custom_call.1} parent=0
    #allocation2 [shape = 'u8[8192]{0}', space=vmem, size = 0x2000, scoped, tag = 'input window, operand 0, single buffered']
    #allocation3 [shape = 's32[1]{0}', space=sflag, size = 0x4, scoped, tag = 'scoped memory for tpu_custom_call.1']
    #allocation4 [shape = 'u8[8192]{0}', space=vmem, size = 0x2000, scoped, tag = 'input window, operand 1, single buffered']
    #allocation5 [shape = 's32[1]{0}', space=sflag, size = 0x4, scoped, tag = 'scoped memory for tpu_custom_call.1']
    %7 = vsyncpa [#allocation3], 0
    %8 = vsyncpa [#allocation5], 0
    // Predicated region
    $region2: #{tpu_custom_call.1} parent=1 // pred_check
      _
    $region3: #{tpu_custom_call.1} parent=1 // pred_check_branch
      %10 = sbr.rel (0) target = $region5
    $region4: #{tpu_custom_call.1} parent=1 // pred_region
      %s12 = ssub.s32 256, 256
      %13 = vsyncadd [#allocation3], %s12
      %s14 = sshll.u32 [#allocation2], 4
      %s15 = int_to_ptr.vmem [resolvable:$true] %s14
      %20 = dma.hbm_to_vmem [thread:$0]  %s0, 256, %s15, [#allocation3], 128, 128, 8
    $region5: #{tpu_custom_call.1} parent=1 // pred_fallthru
      _
    // Predicated region
    $region6: #{tpu_custom_call.1} parent=1 // pred_check
      _
    $region7: #{tpu_custom_call.1} parent=1 // pred_check_branch
      %22 = sbr.rel (0) target = $region9
    $region8: #{tpu_custom_call.1} parent=1 // pred_region
      %s24 = ssub.s32 256, 256
      %25 = vsyncadd [#allocation5], %s24
      %s26 = sshll.u32 [#allocation4], 4
      %s27 = int_to_ptr.vmem [resolvable:$true] %s26
      %32 = dma.hbm_to_vmem [thread:$0]  %s1, 256, %s27, [#allocation5], 128, 128, 8
    $region9: #{tpu_custom_call.1} parent=1 // pred_fallthru
      _
    // Predicated region
    $region10: #{tpu_custom_call.1} parent=1 // pred_check
      _
    $region11: #{tpu_custom_call.1} parent=1 // pred_check_branch
      %34 = sbr.rel (0) target = $region13
    $region12: #{tpu_custom_call.1} parent=1 // pred_region
      %35 = dma.done [#allocation3], 256
    $region13: #{tpu_custom_call.1} parent=1 // pred_fallthru
      _
    // Predicated region
    $region14: #{tpu_custom_call.1} parent=1 // pred_check
      _
    $region15: #{tpu_custom_call.1} parent=1 // pred_check_branch
      %37 = sbr.rel (0) target = $region17
    $region16: #{tpu_custom_call.1} parent=1 // pred_region
      %38 = dma.done [#allocation5], 256
    $region17: #{tpu_custom_call.1} parent=1 // pred_fallthru
      _
    %v39 = vld [vmem:[#allocation2] sm:$0xff]
    %v40 = vld [vmem:[#allocation2 + $0x8] sm:$0xff]
    %v41 = vld [vmem:[#allocation4] sm:$0xff]
    %v42 = vld [vmem:[#allocation4 + $0x8] sm:$0xff]
    %v43 = vsub.f32 0.0, %v39
    %v44 = vsub.f32 0.0, %v40
    %v45 = vmax.f32 %v43, 0.0
    %v46 = vmax.f32 %v44, 0.0
    %v47 = vand.u32 2147483647, %v39
    %v48 = vand.u32 2147483647, %v40
    %v49 = vsub.f32 0.0, %v47
    %v50 = vsub.f32 0.0, %v48
    %v51 = vmul.f32 %v49, 1.442695
    %v52 = vpow.pop %v51
    %v53 = vmul.f32 %v50, 1.442695
    %v54 = vpow.pop %v53
    %v55 = vadd.f32 %v52, 1.0
    %v56 = vlog2.pop %v55
    %v57 = vmul.f32 %v56, 0.6931472
    %v58 = vmul.f32 -0.5, %v52
    %v59 = vadd.f32 %v58, 1.0
    %v60 = vmul.f32 %v59, %v52
    %v61 = vand.u32 2147483647, %v52
    %vm62 = vcmp.lt.f32.partialorder %v61, 0.0004427343
    %v63 = vsel %vm62, %v60, %v57
    %v64 = vadd.f32 %v54, 1.0
    %v65 = vlog2.pop %v64
    %v66 = vmul.f32 %v65, 0.6931472
    %v67 = vmul.f32 -0.5, %v54
    %v68 = vadd.f32 %v67, 1.0
    %v69 = vmul.f32 %v68, %v54
    %v70 = vand.u32 2147483647, %v54
    %vm71 = vcmp.lt.f32.partialorder %v70, 0.0004427343
    %v72 = vsel %vm71, %v69, %v66
    %v73 = vadd.f32 %v45, %v63
    %v74 = vadd.f32 %v46, %v72
    %v75 = vsub.f32 1.0, %v41
    %v76 = vsub.f32 1.0, %v42
    %v77 = vmul.f32 %v75, %v39
    %v78 = vmul.f32 %v76, %v40
    %v79 = vadd.f32 %v77, %v73
    %v80 = vadd.f32 %v78, %v74
    %v81 = vmul.f32 %v41, %v73
    %v82 = vmul.f32 %v42, %v74
    %v83 = vadd.f32 %v41, %v42
    %v84 = vrot.slane %v83, 4
    %v85 = vadd.f32 %v83, %v84
    %v86 = vrot.slane %v85, 2
    %v87 = vadd.f32 %v85, %v86
    %v88 = vrot.slane %v87, 1
    %v89 = vadd.f32 %v87, %v88
    %90 = vst [vmem:[%s2] sm:$0x1] %v89
    %v91 = vadd.f32 %v79, %v80
    %v92 = vrot.slane %v91, 4
    %v93 = vadd.f32 %v91, %v92
    %v94 = vrot.slane %v93, 2
    %v95 = vadd.f32 %v93, %v94
    %v96 = vrot.slane %v95, 1
    %v97 = vadd.f32 %v95, %v96
    %98 = vst [vmem:[%s2 + $0x1] sm:$0x1] %v97
    %v99 = vadd.f32 %v81, %v82
    %v100 = vrot.slane %v99, 4
    %v101 = vadd.f32 %v99, %v100
    %v102 = vrot.slane %v101, 2
    %v103 = vadd.f32 %v101, %v102
    %v104 = vrot.slane %v103, 1
    %v105 = vadd.f32 %v103, %v104
    %106 = vst [vmem:[%s2 + $0x2] sm:$0x1] %v105
    // Predicated region
    $region18: #{tpu_custom_call.1} parent=1 // pred_check
      _
    $region19: #{tpu_custom_call.1} parent=1 // pred_check_branch
      %108 = sbr.rel (0) target = $region21
    $region20: #{tpu_custom_call.1} parent=1 // pred_region
      _
    $region21: #{tpu_custom_call.1} parent=1 // pred_fallthru
      _
    // Predicated region
    $region22: #{tpu_custom_call.1} parent=1 // pred_check
      _
    $region23: #{tpu_custom_call.1} parent=1 // pred_check_branch
      %110 = sbr.rel (0) target = $region25
    $region24: #{tpu_custom_call.1} parent=1 // pred_region
      _
    $region25: #{tpu_custom_call.1} parent=1 // pred_fallthru
      _
    %111 = vsyncpa [#allocation3], 1
    %112 = vsyncpa [#allocation5], 1

</llo_original>
